<compile_context>
chip_gen: v5e
topology: v5e:2x2
jax: 0.10.0
libtpu: 0.0.40
codegen_flags: <defaults>
</compile_context>

<pallas_src>
import math

import jax
import jax.numpy as jnp
from jax.experimental import pallas as pl
from jax.experimental.pallas import tpu as pltpu

_LANE = 128
_SUBLANE = 8
_NEG_INF = -1e30


def _round_up(x, m):
    return ((x + m - 1) // m) * m


def _gelu_exact(x):
    # PyTorch nn.GELU() default = exact erf-based GELU (f32 math).
    return 0.5 * x * (1.0 + jax.lax.erf(x * (1.0 / math.sqrt(2.0))))


def _make_mlp_kernel(num_linear):
    """Builds a fused kernel for `num_linear` Linear layers:
    (Linear + GELU) x (num_linear-1), final Linear, softmax over classes."""

    def kernel(*refs):
        x_ref = refs[0]
        o_ref = refs[-1]
        wb_refs = refs[1:-1]

        h = x_ref[...].astype(jnp.float32)
        logits = None
        for i in range(num_linear):
            w_ref = wb_refs[2 * i]
            b_ref = wb_refs[2 * i + 1]
            # bf16 x bf16 -> f32 accumulation on the MXU; bias add in f32.
            acc = jnp.dot(h.astype(jnp.bfloat16), w_ref[...],
                          preferred_element_type=jnp.float32) + b_ref[...]
            if i + 1 < num_linear:
                h = _gelu_exact(acc)
            else:
                logits = acc

        # Softmax along the class axis (== PyTorch dim=1 for (B, C)).
        # Padded class columns carry a -1e30 bias -> exp underflows to 0.
        m = jnp.max(logits, axis=-1, keepdims=True)
        e = jnp.exp(logits - m)
        denom = jnp.sum(e, axis=-1, keepdims=True)
        o_ref[...] = (e * pl.reciprocal(denom, approx=True)).astype(o_ref.dtype)

    return kernel


def dynamic_classifier_forward(x, params, num_classes, tile_b=None):
    """x: (B, input_dim) f32.
    params: list of (W, b) in original layout, W: (in_dim, out_dim) f32,
    b: (out_dim,) f32 (i.e. W is transposed from PyTorch's (out, in))."""
    B, in_dim = x.shape
    num_linear = len(params)

    # Lane-pad every feature dimension up to a multiple of 128.
    dims = [in_dim] + [w.shape[1] for (w, _) in params]
    dims_p = [_round_up(d, _LANE) for d in dims]

    padded = []
    for i, (w, b) in enumerate(params):
        fi, fo = w.shape
        fi_p, fo_p = dims_p[i], dims_p[i + 1]
        wp = (jnp.zeros((fi_p, fo_p), jnp.float32)
              .at[:fi, :fo].set(w)).astype(jnp.bfloat16)
        # Hidden layers: zero-pad bias (GELU(0)=0 keeps padded lanes inert).
        # Final layer: pad with a huge negative so softmax ignores padded classes.
        fill = _NEG_INF if i + 1 == num_linear else 0.0
        bp = (jnp.full((1, fo_p), fill, jnp.float32)
              .at[0, :fo].set(jnp.reshape(b, (-1,))))
        padded.append((wp, bp))

    # Batch tiling: sublane-align, cap tile at 128 rows.
    b8 = _round_up(B, _SUBLANE)
    tile = tile_b if tile_b is not None else min(128, b8)
    tile = _round_up(tile, _SUBLANE)
    b_pad = _round_up(b8, tile)

    x_p = jnp.zeros((b_pad, dims_p[0]), jnp.float32).at[:B, :in_dim].set(x)

    grid = (b_pad // tile,)
    in_specs = [pl.BlockSpec((tile, dims_p[0]), lambda i: (i, 0))]
    flat_wb = []
    for (wp, bp) in padded:
        # Constant index_map -> weights/biases resident across batch steps.
        in_specs.append(pl.BlockSpec(wp.shape, lambda i: (0, 0)))
        in_specs.append(pl.BlockSpec(bp.shape, lambda i: (0, 0)))
        flat_wb += [wp, bp]
    out_spec = pl.BlockSpec((tile, dims_p[-1]), lambda i: (i, 0))

    # Explicit VMEM budget (double-buffered x/out tiles + resident bf16 weights
    # + f32 intermediates headroom), clamped to a safe range.
    vmem_bytes = 2 * tile * dims_p[0] * 4 + 2 * tile * dims_p[-1] * 4
    for wp, bp in padded:
        vmem_bytes += 2 * wp.size * 2 + 2 * bp.size * 4
    vmem_bytes += 8 * tile * max(dims_p) * 4
    vmem_limit = int(min(max(vmem_bytes, 32 * 1024 * 1024), 100 * 1024 * 1024))

    out = pl.pallas_call(
        _make_mlp_kernel(num_linear),
        out_shape=jax.ShapeDtypeStruct((b_pad, dims_p[-1]), jnp.float32),
        grid=grid,
        in_specs=in_specs,
        out_specs=out_spec,
        compiler_params=pltpu.CompilerParams(
            dimension_semantics=("parallel",),
            vmem_limit_bytes=vmem_limit),
    )(x_p, *flat_wb)

    return out[:B, :num_classes]


def init_params(key, input_dim, num_classes, num_layers):
    """PyTorch nn.Linear-style init (uniform +/- 1/sqrt(fan_in)).
    Weights stored as (in_dim, out_dim), biases as (out_dim,). All f32."""
    params = []
    dims = []
    d = input_dim
    for _ in range(num_layers):
        dims.append((d, d // 2))
        d = d // 2
    dims.append((d, num_classes))

    for (fan_in, fan_out) in dims:
        key, kw, kb = jax.random.split(key, 3)
        bound = 1.0 / math.sqrt(fan_in)
        w = jax.random.uniform(kw, (fan_in, fan_out), jnp.float32, -bound, bound)
        b = jax.random.uniform(kb, (fan_out,), jnp.float32, -bound, bound)
        params.append((w, b))
    return params


def reference_forward_f32(x, params):
    h = x
    n = len(params)
    for i, (w, b) in enumerate(params):
        h = h @ w + b
        if i < n - 1:
            h = _gelu_exact(h)
    return jax.nn.softmax(h, axis=1)


def reference_forward_mixed(x, params):
    """Mirrors the kernel's precision: bf16 dot inputs, f32 accumulation."""
    h = x.astype(jnp.float32)
    n = len(params)
    for i, (w, b) in enumerate(params):
        h = jnp.dot(h.astype(jnp.bfloat16), w.astype(jnp.bfloat16),
                    preferred_element_type=jnp.float32) + b
        if i < n - 1:
            h = _gelu_exact(h)
    return jax.nn.softmax(h, axis=1)


if __name__ == "__main__":
    # Small shapes consistent with the module: input_dim halves each layer.
    B = 8
    INPUT_DIM = 256      # -> 128 -> 64 -> 32 -> NUM_CLASSES
    NUM_CLASSES = 4
    NUM_LAYERS = 3

    key = jax.random.PRNGKey(0)
    key, kx = jax.random.split(key)
    x = jax.random.normal(kx, (B, INPUT_DIM), dtype=jnp.float32)
    params = init_params(key, INPUT_DIM, NUM_CLASSES, NUM_LAYERS)

    out = dynamic_classifier_forward(x, params, NUM_CLASSES)
    out = jax.block_until_ready(out)

    assert out.shape == (B, NUM_CLASSES)

    ref_mixed = reference_forward_mixed(x, params)   # same bf16/f32 recipe
    ref_f32 = reference_forward_f32(x, params)       # full-precision spec
    assert jnp.allclose(out, ref_mixed, atol=1e-2), "mismatch vs bf16-matmul reference"
    assert jnp.allclose(out, ref_f32, atol=3e-2), "mismatch vs f32 reference"
    assert jnp.allclose(jnp.sum(out, axis=1), 1.0, atol=1e-2), "softmax rows must sum to 1"

    print("KERNEL_OK")
</pallas_src>

<mosaic_0001>
module attributes {stable_mosaic.version = 11 : i64} {
  func.func @kernel(%arg0: i32, %arg1: memref<8x256xf32, #tpu.memory_space<vmem>>, %arg2: memref<256x128xbf16, #tpu.memory_space<vmem>>, %arg3: memref<1x128xf32, #tpu.memory_space<vmem>>, %arg4: memref<128x128xbf16, #tpu.memory_space<vmem>>, %arg5: memref<1x128xf32, #tpu.memory_space<vmem>>, %arg6: memref<128x128xbf16, #tpu.memory_space<vmem>>, %arg7: memref<1x128xf32, #tpu.memory_space<vmem>>, %arg8: memref<128x128xbf16, #tpu.memory_space<vmem>>, %arg9: memref<1x128xf32, #tpu.memory_space<vmem>>, %arg10: memref<8x128xf32, #tpu.memory_space<vmem>>) attributes {dimension_semantics = [#tpu.dimension_semantics<parallel>], iteration_bounds = array<i64: 1>, scalar_prefetch = 0 : i64, scratch_operands = 0 : i64, tpu.core_type = #tpu.core_type<tc>, window_params = [{transform_indices = @transform_0, window_bounds = array<i64: 8, 256>}, {pipeline_mode = #tpu.pipeline_mode<synchronous>, transform_indices = @transform_1, window_bounds = array<i64: 256, 128>}, {pipeline_mode = #tpu.pipeline_mode<synchronous>, transform_indices = @transform_2, window_bounds = array<i64: 1, 128>}, {pipeline_mode = #tpu.pipeline_mode<synchronous>, transform_indices = @transform_3, window_bounds = array<i64: 128, 128>}, {pipeline_mode = #tpu.pipeline_mode<synchronous>, transform_indices = @transform_4, window_bounds = array<i64: 1, 128>}, {pipeline_mode = #tpu.pipeline_mode<synchronous>, transform_indices = @transform_5, window_bounds = array<i64: 128, 128>}, {pipeline_mode = #tpu.pipeline_mode<synchronous>, transform_indices = @transform_6, window_bounds = array<i64: 1, 128>}, {pipeline_mode = #tpu.pipeline_mode<synchronous>, transform_indices = @transform_7, window_bounds = array<i64: 128, 128>}, {pipeline_mode = #tpu.pipeline_mode<synchronous>, transform_indices = @transform_8, window_bounds = array<i64: 1, 128>}, {transform_indices = @transform_9, window_bounds = array<i64: 8, 128>}]} {
    %c0 = arith.constant 0 : index
    %c0_0 = arith.constant 0 : index
    %0 = vector.load %arg1[%c0, %c0_0] : memref<8x256xf32, #tpu.memory_space<vmem>>, vector<8x256xf32>
    %1 = arith.truncf %0 : vector<8x256xf32> to vector<8x256xbf16>
    %c0_1 = arith.constant 0 : index
    %c0_2 = arith.constant 0 : index
    %2 = vector.load %arg2[%c0_1, %c0_2] : memref<256x128xbf16, #tpu.memory_space<vmem>>, vector<256x128xbf16>
    %cst = arith.constant dense<0.000000e+00> : vector<8x128xf32>
    %3 = tpu.matmul %1, %2, %cst {dimension_numbers = #tpu.dot_dimension_numbers<[1], [0], [0], [1], [0, 0, 1, 1], [], []>} : vector<8x256xbf16>, vector<256x128xbf16>, vector<8x128xf32> -> vector<8x128xf32>
    %c0_3 = arith.constant 0 : index
    %c0_4 = arith.constant 0 : index
    %4 = vector.load %arg3[%c0_3, %c0_4] : memref<1x128xf32, #tpu.memory_space<vmem>>, vector<1x128xf32>
    %5 = vector.broadcast %4 : vector<1x128xf32> to vector<8x128xf32>
    %6 = arith.addf %3, %5 : vector<8x128xf32>
    %cst_5 = arith.constant 5.000000e-01 : f32
    %7 = vector.broadcast %cst_5 : f32 to vector<8x128xf32>
    %8 = arith.mulf %7, %6 : vector<8x128xf32>
    %cst_6 = arith.constant 0.707106769 : f32
    %9 = vector.broadcast %cst_6 : f32 to vector<8x128xf32>
    %10 = arith.mulf %6, %9 : vector<8x128xf32>
    %11 = math.erf %10 : vector<8x128xf32>
    %cst_7 = arith.constant 1.000000e+00 : f32
    %12 = vector.broadcast %cst_7 : f32 to vector<8x128xf32>
    %13 = arith.addf %12, %11 : vector<8x128xf32>
    %14 = arith.mulf %8, %13 : vector<8x128xf32>
    %15 = arith.truncf %14 : vector<8x128xf32> to vector<8x128xbf16>
    %c0_8 = arith.constant 0 : index
    %c0_9 = arith.constant 0 : index
    %16 = vector.load %arg4[%c0_8, %c0_9] : memref<128x128xbf16, #tpu.memory_space<vmem>>, vector<128x128xbf16>
    %cst_10 = arith.constant dense<0.000000e+00> : vector<8x128xf32>
    %17 = tpu.matmul %15, %16, %cst_10 {dimension_numbers = #tpu.dot_dimension_numbers<[1], [0], [0], [1], [0, 0, 1, 1], [], []>} : vector<8x128xbf16>, vector<128x128xbf16>, vector<8x128xf32> -> vector<8x128xf32>
    %c0_11 = arith.constant 0 : index
    %c0_12 = arith.constant 0 : index
    %18 = vector.load %arg5[%c0_11, %c0_12] : memref<1x128xf32, #tpu.memory_space<vmem>>, vector<1x128xf32>
    %19 = vector.broadcast %18 : vector<1x128xf32> to vector<8x128xf32>
    %20 = arith.addf %17, %19 : vector<8x128xf32>
    %cst_13 = arith.constant 5.000000e-01 : f32
    %21 = vector.broadcast %cst_13 : f32 to vector<8x128xf32>
    %22 = arith.mulf %21, %20 : vector<8x128xf32>
    %cst_14 = arith.constant 0.707106769 : f32
    %23 = vector.broadcast %cst_14 : f32 to vector<8x128xf32>
    %24 = arith.mulf %20, %23 : vector<8x128xf32>
    %25 = math.erf %24 : vector<8x128xf32>
    %cst_15 = arith.constant 1.000000e+00 : f32
    %26 = vector.broadcast %cst_15 : f32 to vector<8x128xf32>
    %27 = arith.addf %26, %25 : vector<8x128xf32>
    %28 = arith.mulf %22, %27 : vector<8x128xf32>
    %29 = arith.truncf %28 : vector<8x128xf32> to vector<8x128xbf16>
    %c0_16 = arith.constant 0 : index
    %c0_17 = arith.constant 0 : index
    %30 = vector.load %arg6[%c0_16, %c0_17] : memref<128x128xbf16, #tpu.memory_space<vmem>>, vector<128x128xbf16>
    %cst_18 = arith.constant dense<0.000000e+00> : vector<8x128xf32>
    %31 = tpu.matmul %29, %30, %cst_18 {dimension_numbers = #tpu.dot_dimension_numbers<[1], [0], [0], [1], [0, 0, 1, 1], [], []>} : vector<8x128xbf16>, vector<128x128xbf16>, vector<8x128xf32> -> vector<8x128xf32>
    %c0_19 = arith.constant 0 : index
    %c0_20 = arith.constant 0 : index
    %32 = vector.load %arg7[%c0_19, %c0_20] : memref<1x128xf32, #tpu.memory_space<vmem>>, vector<1x128xf32>
    %33 = vector.broadcast %32 : vector<1x128xf32> to vector<8x128xf32>
    %34 = arith.addf %31, %33 : vector<8x128xf32>
    %cst_21 = arith.constant 5.000000e-01 : f32
    %35 = vector.broadcast %cst_21 : f32 to vector<8x128xf32>
    %36 = arith.mulf %35, %34 : vector<8x128xf32>
    %cst_22 = arith.constant 0.707106769 : f32
    %37 = vector.broadcast %cst_22 : f32 to vector<8x128xf32>
    %38 = arith.mulf %34, %37 : vector<8x128xf32>
    %39 = math.erf %38 : vector<8x128xf32>
    %cst_23 = arith.constant 1.000000e+00 : f32
    %40 = vector.broadcast %cst_23 : f32 to vector<8x128xf32>
    %41 = arith.addf %40, %39 : vector<8x128xf32>
    %42 = arith.mulf %36, %41 : vector<8x128xf32>
    %43 = arith.truncf %42 : vector<8x128xf32> to vector<8x128xbf16>
    %c0_24 = arith.constant 0 : index
    %c0_25 = arith.constant 0 : index
    %44 = vector.load %arg8[%c0_24, %c0_25] : memref<128x128xbf16, #tpu.memory_space<vmem>>, vector<128x128xbf16>
    %cst_26 = arith.constant dense<0.000000e+00> : vector<8x128xf32>
    %45 = tpu.matmul %43, %44, %cst_26 {dimension_numbers = #tpu.dot_dimension_numbers<[1], [0], [0], [1], [0, 0, 1, 1], [], []>} : vector<8x128xbf16>, vector<128x128xbf16>, vector<8x128xf32> -> vector<8x128xf32>
    %c0_27 = arith.constant 0 : index
    %c0_28 = arith.constant 0 : index
    %46 = vector.load %arg9[%c0_27, %c0_28] : memref<1x128xf32, #tpu.memory_space<vmem>>, vector<1x128xf32>
    %47 = vector.broadcast %46 : vector<1x128xf32> to vector<8x128xf32>
    %48 = arith.addf %45, %47 : vector<8x128xf32>
    %cst_29 = arith.constant dense<0xFF800000> : vector<8xf32>
    %49 = vector.multi_reduction <maximumf>, %48, %cst_29 [1] : vector<8x128xf32> to vector<8xf32>
    %50 = vector.shape_cast %49 : vector<8xf32> to vector<8x1xf32>
    %51 = vector.broadcast %50 : vector<8x1xf32> to vector<8x128xf32>
    %52 = arith.subf %48, %51 : vector<8x128xf32>
    %53 = math.exp %52 : vector<8x128xf32>
    %cst_30 = arith.constant dense<0.000000e+00> : vector<8xf32>
    %54 = vector.multi_reduction <add>, %53, %cst_30 [1] : vector<8x128xf32> to vector<8xf32>
    %55 = vector.shape_cast %54 : vector<8xf32> to vector<8x1xf32>
    %56 = tpu.reciprocal %55 {approx = true} : vector<8x1xf32> -> vector<8x1xf32>
    %57 = vector.broadcast %56 : vector<8x1xf32> to vector<8x128xf32>
    %58 = arith.mulf %53, %57 : vector<8x128xf32>
    %c0_31 = arith.constant 0 : index
    %c0_32 = arith.constant 0 : index
    %59 = vector.load %arg10[%c0_31, %c0_32] : memref<8x128xf32, #tpu.memory_space<vmem>>, vector<8x128xf32>
    tpu.vector_store %arg10[%c0_31, %c0_32], %58 {strides = array<i32>} : memref<8x128xf32, #tpu.memory_space<vmem>>, vector<8x128xf32>,
    return
  }
  func.func @transform_0(%arg0: i32) -> (i32, i32) {
    %c0_i32 = arith.constant 0 : i32
    %c0_i32_0 = arith.constant 0 : i32
    return %arg0, %c0_i32 : i32, i32
  }
  func.func @transform_1(%arg0: i32) -> (i32, i32) {
    %c0_i32 = arith.constant 0 : i32
    %c0_i32_0 = arith.constant 0 : i32
    %c0_i32_1 = arith.constant 0 : i32
    return %c0_i32, %c0_i32_0 : i32, i32
  }
  func.func @transform_2(%arg0: i32) -> (i32, i32) {
    %c0_i32 = arith.constant 0 : i32
    %c0_i32_0 = arith.constant 0 : i32
    %c0_i32_1 = arith.constant 0 : i32
    return %c0_i32, %c0_i32_0 : i32, i32
  }
  func.func @transform_3(%arg0: i32) -> (i32, i32) {
    %c0_i32 = arith.constant 0 : i32
    %c0_i32_0 = arith.constant 0 : i32
    %c0_i32_1 = arith.constant 0 : i32
    return %c0_i32, %c0_i32_0 : i32, i32
  }
  func.func @transform_4(%arg0: i32) -> (i32, i32) {
    %c0_i32 = arith.constant 0 : i32
    %c0_i32_0 = arith.constant 0 : i32
    %c0_i32_1 = arith.constant 0 : i32
    return %c0_i32, %c0_i32_0 : i32, i32
  }
  func.func @transform_5(%arg0: i32) -> (i32, i32) {
    %c0_i32 = arith.constant 0 : i32
    %c0_i32_0 = arith.constant 0 : i32
    %c0_i32_1 = arith.constant 0 : i32
    return %c0_i32, %c0_i32_0 : i32, i32
  }
  func.func @transform_6(%arg0: i32) -> (i32, i32) {
    %c0_i32 = arith.constant 0 : i32
    %c0_i32_0 = arith.constant 0 : i32
    %c0_i32_1 = arith.constant 0 : i32
    return %c0_i32, %c0_i32_0 : i32, i32
  }
  func.func @transform_7(%arg0: i32) -> (i32, i32) {
    %c0_i32 = arith.constant 0 : i32
    %c0_i32_0 = arith.constant 0 : i32
    %c0_i32_1 = arith.constant 0 : i32
    return %c0_i32, %c0_i32_0 : i32, i32
  }
  func.func @transform_8(%arg0: i32) -> (i32, i32) {
    %c0_i32 = arith.constant 0 : i32
    %c0_i32_0 = arith.constant 0 : i32
    %c0_i32_1 = arith.constant 0 : i32
    return %c0_i32, %c0_i32_0 : i32, i32
  }
  func.func @transform_9(%arg0: i32) -> (i32, i32) {
    %c0_i32 = arith.constant 0 : i32
    %c0_i32_0 = arith.constant 0 : i32
    return %arg0, %c0_i32 : i32, i32
  }
}

</mosaic_0001>

<llo_original>
// kernel: tpu_custom_call.1
$region0: #{tpu_custom_call.1}
  #allocation0 [shape = 'u32[]', space=smem, size = 0x4, offset = 0x4, fixed_abs, tag = 'smem constant byte address 0x4 - core index']
  #allocation1 [shape = 'u32[72,128]{1,0:T(1,128)}', space=vmem, size = 0x9000, scoped, tag = 'internal scratch']
  %s0 = inlined_call_operand.hbm [shape: f32[8,256], index: 0, kind: input, shape index: {}]
  %s1 = inlined_call_operand.hbm [shape: bf16[256,128], index: 1, kind: input, shape index: {}]
  %s2 = inlined_call_operand.vmem [shape: f32[1,128], index: 2, kind: input, shape index: {}]
  %s3 = inlined_call_operand.hbm [shape: bf16[128,128], index: 3, kind: input, shape index: {}]
  %s4 = inlined_call_operand.vmem [shape: f32[1,128], index: 4, kind: input, shape index: {}]
  %s5 = inlined_call_operand.hbm [shape: bf16[128,128], index: 5, kind: input, shape index: {}]
  %s6 = inlined_call_operand.vmem [shape: f32[1,128], index: 6, kind: input, shape index: {}]
  %s7 = inlined_call_operand.hbm [shape: bf16[128,128], index: 7, kind: input, shape index: {}]
  %s8 = inlined_call_operand.vmem [shape: f32[1,128], index: 8, kind: input, shape index: {}]
  %s9 = inlined_call_operand.hbm [shape: f32[8,128], index: 9, kind: output, shape index: {}]
  %s10 = sld [smem:[#allocation0]]
  $region66: #{tpu_custom_call.1} parent=0
    _
  %s12 = ssub.s32 1, %s10
  %s13 = scalar_select 0, %s12, %s10
  $region1: #{tpu_custom_call.1} parent=0
    #allocation2 [shape = 'u8[8192]{0}', space=vmem, size = 0x2000, scoped, tag = 'input window, operand 0, single buffered']
    #allocation3 [shape = 's32[1]{0}', space=sflag, size = 0x4, scoped, tag = 'scoped memory for tpu_custom_call.1']
    #allocation4 [shape = 's32[1]{0}', space=sflag, size = 0x4, scoped, tag = 'scoped memory for tpu_custom_call.1']
    #allocation5 [shape = 'u8[65536]{0}', space=vmem, size = 0x10000, scoped, tag = 'input window, operand 1, single buffered']
    #allocation6 [shape = 's32[1]{0}', space=sflag, size = 0x4, scoped, tag = 'scoped memory for tpu_custom_call.1']
    #allocation7 [shape = 'u8[32768]{0}', space=vmem, size = 0x8000, scoped, tag = 'input window, operand 3, single buffered']
    #allocation8 [shape = 'u8[32768]{0}', space=vmem, size = 0x8000, scoped, tag = 'input window, operand 5, single buffered']
    #allocation9 [shape = 's32[1]{0}', space=sflag, size = 0x4, scoped, tag = 'scoped memory for tpu_custom_call.1']
    #allocation10 [shape = 'u8[32768]{0}', space=vmem, size = 0x8000, scoped, tag = 'input window, operand 7, single buffered']
    #allocation11 [shape = 'u8[4096]{0}', space=vmem, size = 0x1000, scoped, tag = 'output window, operand 0, single buffered']
    %14 = vsyncpa [#allocation3], 0
    %15 = vsyncpa [#allocation6], 0
    %16 = vsyncpa [#allocation9], 0
    %17 = vsyncpa [#allocation4], 0
    // Predicated region
    $region2: #{tpu_custom_call.1} parent=1 // pred_check
      _
    $region3: #{tpu_custom_call.1} parent=1 // pred_check_branch
      %19 = sbr.rel (0) target = $region5
    $region4: #{tpu_custom_call.1} parent=1 // pred_region
      %21 = vsyncadd [#allocation3], 0
      %s23 = sshll.u32 %s0, 4
      %s24 = int_to_ptr.hbm [resolvable:$true] %s23
      %s25 = sshll.u32 [#allocation2], 4
      %s26 = int_to_ptr.vmem [resolvable:$true] %s25
      %28 = dma.hbm_to_vmem [thread:$0]  %s24, 256, %s26, [#allocation3]
    $region5: #{tpu_custom_call.1} parent=1 // pred_fallthru
      _
    // Predicated region
    $region6: #{tpu_custom_call.1} parent=1 // pred_check
      _
    $region7: #{tpu_custom_call.1} parent=1 // pred_check_branch
      %30 = sbr.rel (0) target = $region9
    $region8: #{tpu_custom_call.1} parent=1 // pred_region
      %32 = vsyncadd [#allocation6], 0
      %s33 = sshll.u32 %s1, 4
      %s34 = int_to_ptr.hbm [resolvable:$true] %s33
      %s35 = sshll.u32 [#allocation5], 4
      %s36 = int_to_ptr.vmem [resolvable:$true] %s35
      %41 = dma.hbm_to_vmem [thread:$0]  %s34, 2048, %s36, [#allocation6], 64, 64, 4
    $region9: #{tpu_custom_call.1} parent=1 // pred_fallthru
      _
    // Predicated region
    $region10: #{tpu_custom_call.1} parent=1 // pred_check
      _
    $region11: #{tpu_custom_call.1} parent=1 // pred_check_branch
      %43 = sbr.rel (0) target = $region13
    $region12: #{tpu_custom_call.1} parent=1 // pred_region
      _
    $region13: #{tpu_custom_call.1} parent=1 // pred_fallthru
      _
    // Predicated region
    $region14: #{tpu_custom_call.1} parent=1 // pred_check
      _
    $region15: #{tpu_custom_call.1} parent=1 // pred_check_branch
      %45 = sbr.rel (0) target = $region17
    $region16: #{tpu_custom_call.1} parent=1 // pred_region
      %47 = vsyncadd [#allocation6], 0
      %s48 = sshll.u32 %s3, 4
      %s49 = int_to_ptr.hbm [resolvable:$true] %s48
      %s50 = sshll.u32 [#allocation7], 4
      %s51 = int_to_ptr.vmem [resolvable:$true] %s50
      %56 = dma.hbm_to_vmem [thread:$0]  %s49, 1024, %s51, [#allocation6], 64, 64, 4
    $region17: #{tpu_custom_call.1} parent=1 // pred_fallthru
      _
    // Predicated region
    $region18: #{tpu_custom_call.1} parent=1 // pred_check
      _
    $region19: #{tpu_custom_call.1} parent=1 // pred_check_branch
      %58 = sbr.rel (0) target = $region21
    $region20: #{tpu_custom_call.1} parent=1 // pred_region
      _
    $region21: #{tpu_custom_call.1} parent=1 // pred_fallthru
      _
    // Predicated region
    $region22: #{tpu_custom_call.1} parent=1 // pred_check
      _
    $region23: #{tpu_custom_call.1} parent=1 // pred_check_branch
      %60 = sbr.rel (0) target = $region25
    $region24: #{tpu_custom_call.1} parent=1 // pred_region
      %62 = vsyncadd [#allocation9], 0
      %s63 = sshll.u32 %s5, 4
      %s64 = int_to_ptr.hbm [resolvable:$true] %s63
      %s65 = sshll.u32 [#allocation8], 4
      %s66 = int_to_ptr.vmem [resolvable:$true] %s65
      %71 = dma.hbm_to_vmem [thread:$0]  %s64, 1024, %s66, [#allocation9], 64, 64, 4
    $region25: #{tpu_custom_call.1} parent=1 // pred_fallthru
      _
    // Predicated region
    $region26: #{tpu_custom_call.1} parent=1 // pred_check
      _
    $region27: #{tpu_custom_call.1} parent=1 // pred_check_branch
      %73 = sbr.rel (0) target = $region29
    $region28: #{tpu_custom_call.1} parent=1 // pred_region
      _
    $region29: #{tpu_custom_call.1} parent=1 // pred_fallthru
      _
    // Predicated region
    $region30: #{tpu_custom_call.1} parent=1 // pred_check
      _
    $region31: #{tpu_custom_call.1} parent=1 // pred_check_branch
      %75 = sbr.rel (0) target = $region33
    $region32: #{tpu_custom_call.1} parent=1 // pred_region
      %77 = vsyncadd [#allocation9], 0
      %s78 = sshll.u32 %s7, 4
      %s79 = int_to_ptr.hbm [resolvable:$true] %s78
      %s80 = sshll.u32 [#allocation10], 4
      %s81 = int_to_ptr.vmem [resolvable:$true] %s80
      %86 = dma.hbm_to_vmem [thread:$0]  %s79, 1024, %s81, [#allocation9], 64, 64, 4
    $region33: #{tpu_custom_call.1} parent=1 // pred_fallthru
      _
    // Predicated region
    $region34: #{tpu_custom_call.1} parent=1 // pred_check
      _
    $region35: #{tpu_custom_call.1} parent=1 // pred_check_branch
      %88 = sbr.rel (0) target = $region37
    $region36: #{tpu_custom_call.1} parent=1 // pred_region
      _
    $region37: #{tpu_custom_call.1} parent=1 // pred_fallthru
      _
    // Predicated region
    $region38: #{tpu_custom_call.1} parent=1 // pred_check
      _
    $region39: #{tpu_custom_call.1} parent=1 // pred_check_branch
      %90 = sbr.rel (0) target = $region41
    $region40: #{tpu_custom_call.1} parent=1 // pred_region
      %92 = dma.done [#allocation3], 256
    $region41: #{tpu_custom_call.1} parent=1 // pred_fallthru
      _
    // Predicated region
    $region42: #{tpu_custom_call.1} parent=1 // pred_check
      _
    $region43: #{tpu_custom_call.1} parent=1 // pred_check_branch
      %94 = sbr.rel (0) target = $region45
    $region44: #{tpu_custom_call.1} parent=1 // pred_region
      %96 = dma.done [#allocation6], 2048
    $region45: #{tpu_custom_call.1} parent=1 // pred_fallthru
      _
    // Predicated region
    $region46: #{tpu_custom_call.1} parent=1 // pred_check
      _
    $region47: #{tpu_custom_call.1} parent=1 // pred_check_branch
      %98 = sbr.rel (0) target = $region49
    $region48: #{tpu_custom_call.1} parent=1 // pred_region
      %100 = dma.done [#allocation6], 1024
    $region49: #{tpu_custom_call.1} parent=1 // pred_fallthru
      _
    // Predicated region
    $region50: #{tpu_custom_call.1} parent=1 // pred_check
      _
    $region51: #{tpu_custom_call.1} parent=1 // pred_check_branch
      %102 = sbr.rel (0) target = $region53
    $region52: #{tpu_custom_call.1} parent=1 // pred_region
      %104 = dma.done [#allocation9], 1024
    $region53: #{tpu_custom_call.1} parent=1 // pred_fallthru
      _
    // Predicated region
    $region54: #{tpu_custom_call.1} parent=1 // pred_check
      _
    $region55: #{tpu_custom_call.1} parent=1 // pred_check_branch
      %106 = sbr.rel (0) target = $region57
    $region56: #{tpu_custom_call.1} parent=1 // pred_region
      %108 = dma.done [#allocation9], 1024
    $region57: #{tpu_custom_call.1} parent=1 // pred_fallthru
      _
    %v109 = vld [vmem:[#allocation2] sm:$0xff]
    %v110 = vld [vmem:[#allocation2 + $0x8] sm:$0xff]
    %v111 = vpack.c.bf16 %v109, %v109
    %v112 = vpack.c.bf16 %v110, %v110
    %v113 = vld [vmem:[#allocation5] sm:$0xf]
    %v114 = vld [vmem:[#allocation5 + $0x4] sm:$0xf]
    %v115 = vld [vmem:[#allocation5 + $0x8] sm:$0xf]
    %v116 = vld [vmem:[#allocation5 + $0xc] sm:$0xf]
    %v117 = vld [vmem:[#allocation5 + $0x10] sm:$0xf]
    %v118 = vld [vmem:[#allocation5 + $0x14] sm:$0xf]
    %v119 = vld [vmem:[#allocation5 + $0x18] sm:$0xf]
    %v120 = vld [vmem:[#allocation5 + $0x1c] sm:$0xf]
    %v121 = vld [vmem:[#allocation5 + $0x20] sm:$0xf]
    %v122 = vld [vmem:[#allocation5 + $0x24] sm:$0xf]
    %v123 = vld [vmem:[#allocation5 + $0x28] sm:$0xf]
    %v124 = vld [vmem:[#allocation5 + $0x2c] sm:$0xf]
    %v125 = vld [vmem:[#allocation5 + $0x30] sm:$0xf]
    %v126 = vld [vmem:[#allocation5 + $0x34] sm:$0xf]
    %v127 = vld [vmem:[#allocation5 + $0x38] sm:$0xf]
    %v128 = vld [vmem:[#allocation5 + $0x3c] sm:$0xf]
    %v129 = vld [vmem:[#allocation5 + $0x40] sm:$0xf]
    %v130 = vld [vmem:[#allocation5 + $0x44] sm:$0xf]
    %v131 = vld [vmem:[#allocation5 + $0x48] sm:$0xf]
    %v132 = vld [vmem:[#allocation5 + $0x4c] sm:$0xf]
    %v133 = vld [vmem:[#allocation5 + $0x50] sm:$0xf]
    %v134 = vld [vmem:[#allocation5 + $0x54] sm:$0xf]
    %v135 = vld [vmem:[#allocation5 + $0x58] sm:$0xf]
    %v136 = vld [vmem:[#allocation5 + $0x5c] sm:$0xf]
    %v137 = vld [vmem:[#allocation5 + $0x60] sm:$0xf]
    %v138 = vld [vmem:[#allocation5 + $0x64] sm:$0xf]
    %v139 = vld [vmem:[#allocation5 + $0x68] sm:$0xf]
    %v140 = vld [vmem:[#allocation5 + $0x6c] sm:$0xf]
    %v141 = vld [vmem:[#allocation5 + $0x70] sm:$0xf]
    %v142 = vld [vmem:[#allocation5 + $0x74] sm:$0xf]
    %v143 = vld [vmem:[#allocation5 + $0x78] sm:$0xf]
    %v144 = vld [vmem:[#allocation5 + $0x7c] sm:$0xf]
    %v145 = vld [vmem:[%s2] sm:$0x1]
    %v147 = vperm.slane %v145, 0
    %v181 = vunpack.c.l.b16 %v113
    %v182 = vunpack.c.l.b16 %v114
    %v183 = vunpack.c.l.b16 %v115
    %v184 = vunpack.c.l.b16 %v116
    %v185 = vunpack.c.l.b16 %v117
    %v186 = vunpack.c.l.b16 %v118
    %v187 = vunpack.c.l.b16 %v119
    %v188 = vunpack.c.l.b16 %v120
    %v189 = vunpack.c.l.b16 %v121
    %v190 = vunpack.c.l.b16 %v122
    %v191 = vunpack.c.l.b16 %v123
    %v192 = vunpack.c.l.b16 %v124
    %v193 = vunpack.c.l.b16 %v125
    %v194 = vunpack.c.l.b16 %v126
    %v195 = vunpack.c.l.b16 %v127
    %v196 = vunpack.c.l.b16 %v128
    %v197 = vunpack.c.l.b16 %v129
    %v198 = vunpack.c.l.b16 %v130
    %v199 = vunpack.c.l.b16 %v131
    %v200 = vunpack.c.l.b16 %v132
    %v201 = vunpack.c.l.b16 %v133
    %v202 = vunpack.c.l.b16 %v134
    %v203 = vunpack.c.l.b16 %v135
    %v204 = vunpack.c.l.b16 %v136
    %v205 = vunpack.c.l.b16 %v137
    %v206 = vunpack.c.l.b16 %v138
    %v207 = vunpack.c.l.b16 %v139
    %v208 = vunpack.c.l.b16 %v140
    %v209 = vunpack.c.l.b16 %v141
    %v210 = vunpack.c.l.b16 %v142
    %v211 = vunpack.c.l.b16 %v143
    %v212 = vunpack.c.l.b16 %v144
    %v213 = vpack.c.b16 %v182, %v181
    %v214 = vpack.c.b16 %v184, %v183
    %v215 = vpack.c.b16 %v186, %v185
    %v216 = vpack.c.b16 %v188, %v187
    %v217 = vpack.c.b16 %v190, %v189
    %v218 = vpack.c.b16 %v192, %v191
    %v219 = vpack.c.b16 %v194, %v193
    %v220 = vpack.c.b16 %v196, %v195
    %v221 = vpack.c.b16 %v198, %v197
    %v222 = vpack.c.b16 %v200, %v199
    %v223 = vpack.c.b16 %v202, %v201
    %v224 = vpack.c.b16 %v204, %v203
    %v225 = vpack.c.b16 %v206, %v205
    %v226 = vpack.c.b16 %v208, %v207
    %v227 = vpack.c.b16 %v210, %v209
    %v228 = vpack.c.b16 %v212, %v211
    %245 = vmatpush.bf16.msra.mxu0 %v220
    %246 = vmatpush.bf16.msra.mxu0 %v219
    %247 = vmatpush.bf16.msra.mxu0 %v218
    %248 = vmatpush.bf16.msra.mxu0 %v217
    %249 = vmatpush.bf16.msra.mxu0 %v216
    %250 = vmatpush.bf16.msra.mxu0 %v215
    %251 = vmatpush.bf16.msra.mxu0 %v214
    %252 = vmatpush.bf16.msra.mxu0 %v213
    %253 = vmatmul.bf16.gmra.mxu0 %v111
    %v254 = vpop.f32.mrf.mxu0
    %v255 = vadd.f32 %v147, %v254
    %v256 = vpop.f32.mrf.mxu0
    %257 = vdwg.mxu0
    %258 = vmatpush.bf16.msra.mxu0 %v228
    %259 = vmatpush.bf16.msra.mxu0 %v227
    %260 = vmatpush.bf16.msra.mxu0 %v226
    %261 = vmatpush.bf16.msra.mxu0 %v225
    %262 = vmatpush.bf16.msra.mxu0 %v224
    %263 = vmatpush.bf16.msra.mxu0 %v223
    %264 = vmatpush.bf16.msra.mxu0 %v222
    %265 = vmatpush.bf16.msra.mxu0 %v221
    %266 = vmatmul.bf16.gmra.mxu0 %v112
    %v267 = vpop.f32.mrf.mxu0
    %v268 = vadd.f32 %v255, %v267
    %v269 = vpop.f32.mrf.mxu0
    %270 = vdwg.mxu0
    %v271 = vmul.f32 %v268, 0.5
    %v272 = vmul.f32 %v268, 0.70710677
    %v273 = vmul.f32 %v272, %v272
    %v274 = vmin.f32 16.0, %v273
    %v275 = vmul.f32 %v274, 2.1237322e-06
    %v276 = vadd.f32 %v275, 0.00028619796
    %v277 = vmul.f32 %v274, %v276
    %v278 = vadd.f32 %v277, 0.0036580483
    %v279 = vmul.f32 %v274, %v278
    %v280 = vadd.f32 %v279, 0.05243302
    %v281 = vmul.f32 %v274, %v280
    %v282 = vadd.f32 %v281, 0.18741608
    %v283 = vmul.f32 %v274, %v282
    %v284 = vadd.f32 %v283, 1.1283791
    %v285 = vmul.f32 %v272, %v284
    %v286 = vmul.f32 %v274, 3.8918573e-05
    %v287 = vadd.f32 %v286, 0.001143296
    %v288 = vmul.f32 %v274, %v287
    %v289 = vadd.f32 %v288, 0.014752088
    %v290 = vmul.f32 %v274, %v289
    %v291 = vadd.f32 %v290, 0.112945676
    %v292 = vmul.f32 %v274, %v291
    %v293 = vadd.f32 %v292, 0.4994258
    %v294 = vmul.f32 %v274, %v293
    %v295 = vadd.f32 %v294, 1.0
    %v296 = vrcp.pop %v295
    %v297 = vmul.f32 %v295, %v296
    %v298 = vsub.f32 1.0, %v297
    %v299 = vmul.f32 %v296, %v298
    %v300 = vadd.f32 %v296, %v299
    %vm301 = vweird.f32 %v295
    %vm302 = vweird.f32 %v296
    %vm303 = vmor %vm301, %vm302
    %v304 = vsel %vm303, %v296, %v300
    %v305 = vand.u32 2147483647, %v295
    %vm306 = vcmp.eq.f32.partialorder %v305, 8.507059e+37
    %v307 = vand.u32 %v295, 2147483648
    %v308 = vor.u32 1.1754944e-38, %v307
    %v309 = vsel %vm306, %v308, %v304
    %v310 = vmul.f32 %v285, %v309
    %v311 = vmin.f32 %v310, 1.0
    %v312 = vmax.f32 %v311, -1.0
    %v313 = vadd.f32 %v312, 1.0
    %v314 = vmul.f32 %v271, %v313
    %v315 = vpack.c.bf16 %v314, %v314
    %v316 = vld [vmem:[#allocation7] sm:$0xf]
    %v317 = vld [vmem:[#allocation7 + $0x4] sm:$0xf]
    %v318 = vld [vmem:[#allocation7 + $0x8] sm:$0xf]
    %v319 = vld [vmem:[#allocation7 + $0xc] sm:$0xf]
    %v320 = vld [vmem:[#allocation7 + $0x10] sm:$0xf]
    %v321 = vld [vmem:[#allocation7 + $0x14] sm:$0xf]
    %v322 = vld [vmem:[#allocation7 + $0x18] sm:$0xf]
    %v323 = vld [vmem:[#allocation7 + $0x1c] sm:$0xf]
    %v324 = vld [vmem:[#allocation7 + $0x20] sm:$0xf]
    %v325 = vld [vmem:[#allocation7 + $0x24] sm:$0xf]
    %v326 = vld [vmem:[#allocation7 + $0x28] sm:$0xf]
    %v327 = vld [vmem:[#allocation7 + $0x2c] sm:$0xf]
    %v328 = vld [vmem:[#allocation7 + $0x30] sm:$0xf]
    %v329 = vld [vmem:[#allocation7 + $0x34] sm:$0xf]
    %v330 = vld [vmem:[#allocation7 + $0x38] sm:$0xf]
    %v331 = vld [vmem:[#allocation7 + $0x3c] sm:$0xf]
    %v332 = vld [vmem:[%s4] sm:$0x1]
    %v334 = vperm.slane %v332, 0
    %v352 = vunpack.c.l.b16 %v316
    %v353 = vunpack.c.l.b16 %v317
    %v354 = vunpack.c.l.b16 %v318
    %v355 = vunpack.c.l.b16 %v319
    %v356 = vunpack.c.l.b16 %v320
    %v357 = vunpack.c.l.b16 %v321
    %v358 = vunpack.c.l.b16 %v322
    %v359 = vunpack.c.l.b16 %v323
    %v360 = vunpack.c.l.b16 %v324
    %v361 = vunpack.c.l.b16 %v325
    %v362 = vunpack.c.l.b16 %v326
    %v363 = vunpack.c.l.b16 %v327
    %v364 = vunpack.c.l.b16 %v328
    %v365 = vunpack.c.l.b16 %v329
    %v366 = vunpack.c.l.b16 %v330
    %v367 = vunpack.c.l.b16 %v331
    %v368 = vpack.c.b16 %v353, %v352
    %v369 = vpack.c.b16 %v355, %v354
    %v370 = vpack.c.b16 %v357, %v356
    %v371 = vpack.c.b16 %v359, %v358
    %v372 = vpack.c.b16 %v361, %v360
    %v373 = vpack.c.b16 %v363, %v362
    %v374 = vpack.c.b16 %v365, %v364
    %v375 = vpack.c.b16 %v367, %v366
    %384 = vmatpush.bf16.msra.mxu0 %v375
    %385 = vmatpush.bf16.msra.mxu0 %v374
    %386 = vmatpush.bf16.msra.mxu0 %v373
    %387 = vmatpush.bf16.msra.mxu0 %v372
    %388 = vmatpush.bf16.msra.mxu0 %v371
    %389 = vmatpush.bf16.msra.mxu0 %v370
    %390 = vmatpush.bf16.msra.mxu0 %v369
    %391 = vmatpush.bf16.msra.mxu0 %v368
    %392 = vmatmul.bf16.gmra.mxu0 %v315
    %v393 = vpop.f32.mrf.mxu0
    %v394 = vadd.f32 %v334, %v393
    %v395 = vpop.f32.mrf.mxu0
    %396 = vdwg.mxu0
    %v397 = vmul.f32 %v394, 0.5
    %v398 = vmul.f32 %v394, 0.70710677
    %v399 = vmul.f32 %v398, %v398
    %v400 = vmin.f32 16.0, %v399
    %v401 = vmul.f32 %v400, 2.1237322e-06
    %v402 = vadd.f32 %v401, 0.00028619796
    %v403 = vmul.f32 %v400, %v402
    %v404 = vadd.f32 %v403, 0.0036580483
    %v405 = vmul.f32 %v400, %v404
    %v406 = vadd.f32 %v405, 0.05243302
    %v407 = vmul.f32 %v400, %v406
    %v408 = vadd.f32 %v407, 0.18741608
    %v409 = vmul.f32 %v400, %v408
    %v410 = vadd.f32 %v409, 1.1283791
    %v411 = vmul.f32 %v398, %v410
    %v412 = vmul.f32 %v400, 3.8918573e-05
    %v413 = vadd.f32 %v412, 0.001143296
    %v414 = vmul.f32 %v400, %v413
    %v415 = vadd.f32 %v414, 0.014752088
    %v416 = vmul.f32 %v400, %v415
    %v417 = vadd.f32 %v416, 0.112945676
    %v418 = vmul.f32 %v400, %v417
    %v419 = vadd.f32 %v418, 0.4994258
    %v420 = vmul.f32 %v400, %v419
    %v421 = vadd.f32 %v420, 1.0
    %v422 = vrcp.pop %v421
    %v423 = vmul.f32 %v421, %v422
    %v424 = vsub.f32 1.0, %v423
    %v425 = vmul.f32 %v422, %v424
    %v426 = vadd.f32 %v422, %v425
    %vm427 = vweird.f32 %v421
    %vm428 = vweird.f32 %v422
    %vm429 = vmor %vm427, %vm428
    %v430 = vsel %vm429, %v422, %v426
    %v431 = vand.u32 2147483647, %v421
    %vm432 = vcmp.eq.f32.partialorder %v431, 8.507059e+37
    %v433 = vand.u32 %v421, 2147483648
    %v434 = vor.u32 1.1754944e-38, %v433
    %v435 = vsel %vm432, %v434, %v430
    %v436 = vmul.f32 %v411, %v435
    %v437 = vmin.f32 %v436, 1.0
    %v438 = vmax.f32 %v437, -1.0
    %v439 = vadd.f32 %v438, 1.0
    %v440 = vmul.f32 %v397, %v439
    %v441 = vpack.c.bf16 %v440, %v440
    %v442 = vld [vmem:[#allocation8] sm:$0xf]
    %v443 = vld [vmem:[#allocation8 + $0x4] sm:$0xf]
    %v444 = vld [vmem:[#allocation8 + $0x8] sm:$0xf]
    %v445 = vld [vmem:[#allocation8 + $0xc] sm:$0xf]
    %v446 = vld [vmem:[#allocation8 + $0x10] sm:$0xf]
    %v447 = vld [vmem:[#allocation8 + $0x14] sm:$0xf]
    %v448 = vld [vmem:[#allocation8 + $0x18] sm:$0xf]
    %v449 = vld [vmem:[#allocation8 + $0x1c] sm:$0xf]
    %v450 = vld [vmem:[#allocation8 + $0x20] sm:$0xf]
    %v451 = vld [vmem:[#allocation8 + $0x24] sm:$0xf]
    %v452 = vld [vmem:[#allocation8 + $0x28] sm:$0xf]
    %v453 = vld [vmem:[#allocation8 + $0x2c] sm:$0xf]
    %v454 = vld [vmem:[#allocation8 + $0x30] sm:$0xf]
    %v455 = vld [vmem:[#allocation8 + $0x34] sm:$0xf]
    %v456 = vld [vmem:[#allocation8 + $0x38] sm:$0xf]
    %v457 = vld [vmem:[#allocation8 + $0x3c] sm:$0xf]
    %v458 = vld [vmem:[%s6] sm:$0x1]
    %v460 = vperm.slane %v458, 0
    %v478 = vunpack.c.l.b16 %v442
    %v479 = vunpack.c.l.b16 %v443
    %v480 = vunpack.c.l.b16 %v444
    %v481 = vunpack.c.l.b16 %v445
    %v482 = vunpack.c.l.b16 %v446
    %v483 = vunpack.c.l.b16 %v447
    %v484 = vunpack.c.l.b16 %v448
    %v485 = vunpack.c.l.b16 %v449
    %v486 = vunpack.c.l.b16 %v450
    %v487 = vunpack.c.l.b16 %v451
    %v488 = vunpack.c.l.b16 %v452
    %v489 = vunpack.c.l.b16 %v453
    %v490 = vunpack.c.l.b16 %v454
    %v491 = vunpack.c.l.b16 %v455
    %v492 = vunpack.c.l.b16 %v456
    %v493 = vunpack.c.l.b16 %v457
    %v494 = vpack.c.b16 %v479, %v478
    %v495 = vpack.c.b16 %v481, %v480
    %v496 = vpack.c.b16 %v483, %v482
    %v497 = vpack.c.b16 %v485, %v484
    %v498 = vpack.c.b16 %v487, %v486
    %v499 = vpack.c.b16 %v489, %v488
    %v500 = vpack.c.b16 %v491, %v490
    %v501 = vpack.c.b16 %v493, %v492
    %510 = vmatpush.bf16.msra.mxu0 %v501
    %511 = vmatpush.bf16.msra.mxu0 %v500
    %512 = vmatpush.bf16.msra.mxu0 %v499
    %513 = vmatpush.bf16.msra.mxu0 %v498
    %514 = vmatpush.bf16.msra.mxu0 %v497
    %515 = vmatpush.bf16.msra.mxu0 %v496
    %516 = vmatpush.bf16.msra.mxu0 %v495
    %517 = vmatpush.bf16.msra.mxu0 %v494
    %518 = vmatmul.bf16.gmra.mxu0 %v441
    %v519 = vpop.f32.mrf.mxu0
    %v520 = vadd.f32 %v460, %v519
    %v521 = vpop.f32.mrf.mxu0
    %522 = vdwg.mxu0
    %v523 = vmul.f32 %v520, 0.5
    %v524 = vmul.f32 %v520, 0.70710677
    %v525 = vmul.f32 %v524, %v524
    %v526 = vmin.f32 16.0, %v525
    %v527 = vmul.f32 %v526, 2.1237322e-06
    %v528 = vadd.f32 %v527, 0.00028619796
    %v529 = vmul.f32 %v526, %v528
    %v530 = vadd.f32 %v529, 0.0036580483
    %v531 = vmul.f32 %v526, %v530
    %v532 = vadd.f32 %v531, 0.05243302
    %v533 = vmul.f32 %v526, %v532
    %v534 = vadd.f32 %v533, 0.18741608
    %v535 = vmul.f32 %v526, %v534
    %v536 = vadd.f32 %v535, 1.1283791
    %v537 = vmul.f32 %v524, %v536
    %v538 = vmul.f32 %v526, 3.8918573e-05
    %v539 = vadd.f32 %v538, 0.001143296
    %v540 = vmul.f32 %v526, %v539
    %v541 = vadd.f32 %v540, 0.014752088
    %v542 = vmul.f32 %v526, %v541
    %v543 = vadd.f32 %v542, 0.112945676
    %v544 = vmul.f32 %v526, %v543
    %v545 = vadd.f32 %v544, 0.4994258
    %v546 = vmul.f32 %v526, %v545
    %v547 = vadd.f32 %v546, 1.0
    %v548 = vrcp.pop %v547
    %v549 = vmul.f32 %v547, %v548
    %v550 = vsub.f32 1.0, %v549
    %v551 = vmul.f32 %v548, %v550
    %v552 = vadd.f32 %v548, %v551
    %vm553 = vweird.f32 %v547
    %vm554 = vweird.f32 %v548
    %vm555 = vmor %vm553, %vm554
    %v556 = vsel %vm555, %v548, %v552
    %v557 = vand.u32 2147483647, %v547
    %vm558 = vcmp.eq.f32.partialorder %v557, 8.507059e+37
    %v559 = vand.u32 %v547, 2147483648
    %v560 = vor.u32 1.1754944e-38, %v559
    %v561 = vsel %vm558, %v560, %v556
    %v562 = vmul.f32 %v537, %v561
    %v563 = vmin.f32 %v562, 1.0
    %v564 = vmax.f32 %v563, -1.0
    %v565 = vadd.f32 %v564, 1.0
    %v566 = vmul.f32 %v523, %v565
    %v567 = vpack.c.bf16 %v566, %v566
    %v568 = vld [vmem:[#allocation10] sm:$0xf]
    %v569 = vld [vmem:[#allocation10 + $0x4] sm:$0xf]
    %v570 = vld [vmem:[#allocation10 + $0x8] sm:$0xf]
    %v571 = vld [vmem:[#allocation10 + $0xc] sm:$0xf]
    %v572 = vld [vmem:[#allocation10 + $0x10] sm:$0xf]
    %v573 = vld [vmem:[#allocation10 + $0x14] sm:$0xf]
    %v574 = vld [vmem:[#allocation10 + $0x18] sm:$0xf]
    %v575 = vld [vmem:[#allocation10 + $0x1c] sm:$0xf]
    %v576 = vld [vmem:[#allocation10 + $0x20] sm:$0xf]
    %v577 = vld [vmem:[#allocation10 + $0x24] sm:$0xf]
    %v578 = vld [vmem:[#allocation10 + $0x28] sm:$0xf]
    %v579 = vld [vmem:[#allocation10 + $0x2c] sm:$0xf]
    %v580 = vld [vmem:[#allocation10 + $0x30] sm:$0xf]
    %v581 = vld [vmem:[#allocation10 + $0x34] sm:$0xf]
    %v582 = vld [vmem:[#allocation10 + $0x38] sm:$0xf]
    %v583 = vld [vmem:[#allocation10 + $0x3c] sm:$0xf]
    %v584 = vld [vmem:[%s8] sm:$0x1]
    %v586 = vperm.slane %v584, 0
    %v604 = vunpack.c.l.b16 %v568
    %v605 = vunpack.c.l.b16 %v569
    %v606 = vunpack.c.l.b16 %v570
    %v607 = vunpack.c.l.b16 %v571
    %v608 = vunpack.c.l.b16 %v572
    %v609 = vunpack.c.l.b16 %v573
    %v610 = vunpack.c.l.b16 %v574
    %v611 = vunpack.c.l.b16 %v575
    %v612 = vunpack.c.l.b16 %v576
    %v613 = vunpack.c.l.b16 %v577
    %v614 = vunpack.c.l.b16 %v578
    %v615 = vunpack.c.l.b16 %v579
    %v616 = vunpack.c.l.b16 %v580
    %v617 = vunpack.c.l.b16 %v581
    %v618 = vunpack.c.l.b16 %v582
    %v619 = vunpack.c.l.b16 %v583
    %v620 = vpack.c.b16 %v605, %v604
    %v621 = vpack.c.b16 %v607, %v606
    %v622 = vpack.c.b16 %v609, %v608
    %v623 = vpack.c.b16 %v611, %v610
    %v624 = vpack.c.b16 %v613, %v612
    %v625 = vpack.c.b16 %v615, %v614
    %v626 = vpack.c.b16 %v617, %v616
    %v627 = vpack.c.b16 %v619, %v618
    %636 = vmatpush.bf16.msra.mxu0 %v627
    %637 = vmatpush.bf16.msra.mxu0 %v626
    %638 = vmatpush.bf16.msra.mxu0 %v625
    %639 = vmatpush.bf16.msra.mxu0 %v624
    %640 = vmatpush.bf16.msra.mxu0 %v623
    %641 = vmatpush.bf16.msra.mxu0 %v622
    %642 = vmatpush.bf16.msra.mxu0 %v621
    %643 = vmatpush.bf16.msra.mxu0 %v620
    %644 = vmatmul.bf16.gmra.mxu0 %v567
    %v645 = vpop.f32.mrf.mxu0
    %v646 = vadd.f32 %v586, %v645
    %v647 = vpop.f32.mrf.mxu0
    %648 = vdwg.mxu0
    %649 = vmax.xlane.f32.xlu0 %v646
    %v650 = vpop.xlane.xlu0 %649
    %v651 = vsub.f32 %v646, %v650
    %v652 = vmul.f32 %v651, 1.442695
    %v653 = vpow.pop %v652
    %654 = vadd.xlane.f32.xlu0 %v653
    %v655 = vpop.xlane.xlu0 %654
    %v656 = vrcp.pop %v655
    %v657 = vmul.f32 %v653, %v656
    %658 = vst [vmem:[#allocation11] sm:$0xff] %v657
    // Predicated region
    $region58: #{tpu_custom_call.1} parent=1 // pred_check
      _
    $region59: #{tpu_custom_call.1} parent=1 // pred_check_branch
      %660 = sbr.rel (0) target = $region61
    $region60: #{tpu_custom_call.1} parent=1 // pred_region
      %662 = vsyncadd [#allocation4], 0
      %s664 = sshll.u32 [#allocation11], 4
      %s665 = int_to_ptr.vmem [resolvable:$true] %s664
      %s666 = sshll.u32 %s9, 4
      %s667 = int_to_ptr.hbm [resolvable:$true] %s666
      %669 = dma.vmem_to_hbm [thread:$0]  %s665, 128, %s667, [#allocation4]
    $region61: #{tpu_custom_call.1} parent=1 // pred_fallthru
      _
    // Predicated region
    $region62: #{tpu_custom_call.1} parent=1 // pred_check
      _
    $region63: #{tpu_custom_call.1} parent=1 // pred_check_branch
      %671 = sbr.rel (0) target = $region65
    $region64: #{tpu_custom_call.1} parent=1 // pred_region
      %673 = dma.done [#allocation4], 128
    $region65: #{tpu_custom_call.1} parent=1 // pred_fallthru
      _
    %674 = vsyncpa [#allocation3], 1
    %675 = vsyncpa [#allocation6], 1
    %676 = vsyncpa [#allocation9], 1
    %677 = vsyncpa [#allocation4], 1

</llo_original>
